<compile_context>
chip_gen: v5e
topology: v5e:2x2
jax: 0.10.0
libtpu: 0.0.40
codegen_flags: <defaults>
</compile_context>

<pallas_src>
import jax
import jax.numpy as jnp
from jax import lax
from jax.experimental import pallas as pl
from jax.experimental.pallas import tpu as pltpu


def _round_up(x, m):
    return ((x + m - 1) // m) * m


def _pick_tile(dim_pad, target, align=128):
    """Largest multiple of `align` that divides `dim_pad` and is <= target.

    `dim_pad` must already be a multiple of `align`.  Choosing a divisor means
    the (frozen) weight matrices never need a per-call pad copy when the model
    dims are 128-aligned.
    """
    target = max(target, align)
    best = align
    d = align
    hi = min(target, dim_pad)
    while d <= hi:
        if dim_pad % d == 0:
            best = d
        d += align
    return best


def _tpu_generation_and_vmem():
    """Best-effort (chip generation, per-core VMEM capacity in bytes)."""
    kind = ""
    try:
        kind = jax.devices()[0].device_kind.lower()
    except Exception:
        pass
    if "v7" in kind or "tpu7" in kind or "7x" in kind:
        gen = "v7x"
    elif "v6" in kind:
        gen = "v6e"
    elif "v5 lite" in kind or "v5e" in kind or "v5lite" in kind:
        gen = "v5e"
    else:
        gen = "unknown"
    vmem = None
    try:
        vmem = int(pltpu.get_tpu_info().vmem_capacity_bytes)
    except Exception:
        pass
    if vmem is None or vmem <= 0:
        vmem = {"v5e": 128, "v6e": 128, "v7x": 64}.get(gen, 64) * 1024 * 1024
    return gen, vmem


def _safe_q_proj_kernel(x_ref, xs_ref, w_ref, ws_ref, o_ref, acc_ref):
    # grid = (M//tm, N//tn, K//tk); K (reduction) is the last, "arbitrary" axis.
    @pl.when(pl.program_id(2) == 0)
    def _init():
        acc_ref[...] = jnp.zeros_like(acc_ref)

    # Weight tiles are [tn, tk] slices of the PyTorch [O, H] matrices; contract
    # the last axis of both operands (x @ W^T == trans_b matmul, MXU-native,
    # no XLU transpose).  Both matmuls fold into one accumulator RMW.
    dn = (((1,), (1,)), ((), ()))
    acc_ref[...] += (
        lax.dot_general(x_ref[...], w_ref[...], dn,
                        preferred_element_type=jnp.float32)
        + lax.dot_general(xs_ref[...], ws_ref[...], dn,
                          preferred_element_type=jnp.float32)
    )

    @pl.when(pl.program_id(2) == pl.num_programs(2) - 1)
    def _finalize():
        o_ref[...] = acc_ref[...].astype(o_ref.dtype)


def safe_ft_q_proj(hidden_states, safe_hidden_states, w_orig, w_safe,
                   *, tm=None, tn=None, tk=None):
    """hidden_states / safe_hidden_states: [B, S, H] bf16
       w_orig / w_safe: [O, H] (PyTorch Linear layout), bf16
       returns: [B, S, O] bf16
    """
    B, S, H = hidden_states.shape
    O, H2 = w_orig.shape
    assert H2 == H and w_safe.shape == (O, H)
    assert safe_hidden_states.shape == (B, S, H)

    M, K, N = B * S, H, O
    N128 = _round_up(N, 128)
    K128 = _round_up(K, 128)

    gen, vmem_cap = _tpu_generation_and_vmem()
    decode = M <= 64

    # ---- generation-aware tile targets ----------------------------------
    if decode:
        # Weight-bandwidth bound: tiny row tile, big weight tiles.
        tm_t = _round_up(M, 16)                   # bf16 packs 16 sublanes/vreg
        if gen == "v6e":
            tn_t, tk_t = 2048, 2048
        elif gen == "v7x":
            tn_t, tk_t = 2048, 1024
        else:                                     # v5e / unknown
            tn_t, tk_t = 1024, 1024
        # v7x: keep >= 2 j-blocks so both TensorCores share the weight stream.
        tn_cap = max(128, N128 // 2) if gen == "v7x" else N128
    else:
        # Prefill: reach the HBM->MXU crossover of each generation.
        if gen == "v6e":
            tm_t, tn_t, tk_t = 1024, 2048, 1024   # ~683 FLOP/byte, ~40 MiB VMEM
        elif gen == "v5e":
            tm_t, tn_t, tk_t = 512, 512, 512      # ~256 FLOP/byte, ~6 MiB VMEM
        else:                                     # v7x / unknown (64 MiB parts)
            tm_t, tn_t, tk_t = 512, 1024, 512     # ~341 FLOP/byte, ~10 MiB VMEM
        tn_cap = N128

    if tm is None:
        tm = min(tm_t, _round_up(M, 16))
    if tn is None:
        tn = _pick_tile(N128, min(tn_t, tn_cap))
    if tk is None:
        tk = _pick_tile(K128, tk_t)

    M_pad = _round_up(M, tm)
    N_pad = _round_up(N, tn)
    K_pad = _round_up(K, tk)

    x = hidden_states.reshape(M, K)
    xs = safe_hidden_states.reshape(M, K)
    w, ws = w_orig, w_safe

    # Zero-pad to tile multiples (zeros contribute nothing).  With the divisor
    # tile selection above the frozen weights are only padded when N or K is
    # not 128-aligned (toy shapes); real q_proj shapes take the no-copy path.
    if (M_pad, K_pad) != (M, K):
        x = jnp.pad(x, ((0, M_pad - M), (0, K_pad - K)))
        xs = jnp.pad(xs, ((0, M_pad - M), (0, K_pad - K)))
    if (N_pad, K_pad) != (N, K):
        w = jnp.pad(w, ((0, N_pad - N), (0, K_pad - K)))
        ws = jnp.pad(ws, ((0, N_pad - N), (0, K_pad - K)))

    gi, gj, gk = M_pad // tm, N_pad // tn, K_pad // tk
    grid = (gi, gj, gk)

    elt = 2  # bf16 bytes
    cost = pl.CostEstimate(
        flops=2 * 2 * M * N * K,                          # two matmuls
        transcendentals=0,
        bytes_accessed=(2 * M_pad * K_pad * elt * gj      # x, xs re-read per j-block
                        + 2 * N_pad * K_pad * elt * gi    # W, W_safe re-read per i-block
                        + M_pad * N_pad * elt),           # output written once
    )

    # ~3/4 of per-core VMEM: ~96 MiB on v5e/v6e, ~48 MiB on v7x.
    vmem_limit = int(min(vmem_cap * 3 // 4, 112 * 1024 * 1024))

    out = pl.pallas_call(
        _safe_q_proj_kernel,
        out_shape=jax.ShapeDtypeStruct((M_pad, N_pad), jnp.bfloat16),
        grid_spec=pltpu.PrefetchScalarGridSpec(
            num_scalar_prefetch=0,
            grid=grid,
            in_specs=[
                pl.BlockSpec((tm, tk), lambda i, j, k: (i, k)),  # hidden_states
                pl.BlockSpec((tm, tk), lambda i, j, k: (i, k)),  # safe_hidden_states
                pl.BlockSpec((tn, tk), lambda i, j, k: (j, k)),  # W_orig  [O, H]
                pl.BlockSpec((tn, tk), lambda i, j, k: (j, k)),  # W_safe  [O, H]
            ],
            out_specs=pl.BlockSpec((tm, tn), lambda i, j, k: (i, j)),
            scratch_shapes=[pltpu.VMEM((tm, tn), jnp.float32)],
        ),
        compiler_params=pltpu.CompilerParams(
            dimension_semantics=("parallel", "parallel", "arbitrary"),
            vmem_limit_bytes=vmem_limit,
        ),
        cost_estimate=cost,
    )(x, xs, w, ws)

    if (M_pad, N_pad) != (M, N):
        out = out[:M, :N]
    return out.reshape(B, S, N)


def reference(hidden_states, safe_hidden_states, w_orig, w_safe):
    orig = jnp.einsum("bsh,oh->bso", hidden_states.astype(jnp.float32),
                      w_orig.astype(jnp.float32))
    safe = jnp.einsum("bsh,oh->bso", safe_hidden_states.astype(jnp.float32),
                      w_safe.astype(jnp.float32))
    return (orig + safe).astype(jnp.bfloat16)


def _run_case(key, B, S, H, O):
    k1, k2, k3, k4 = jax.random.split(key, 4)
    hs = jax.random.normal(k1, (B, S, H), dtype=jnp.float32).astype(jnp.bfloat16)
    shs = jax.random.normal(k2, (B, S, H), dtype=jnp.float32).astype(jnp.bfloat16)
    bound = 1.0 / (H ** 0.5)
    w_orig = jax.random.uniform(k3, (O, H), minval=-bound, maxval=bound,
                                dtype=jnp.float32).astype(jnp.bfloat16)
    w_safe = jax.random.uniform(k4, (O, H), minval=-bound, maxval=bound,
                                dtype=jnp.float32).astype(jnp.bfloat16)

    out = jax.block_until_ready(safe_ft_q_proj(hs, shs, w_orig, w_safe))
    ref = reference(hs, shs, w_orig, w_safe)
    assert out.shape == (B, S, O) and out.dtype == jnp.bfloat16
    err = jnp.max(jnp.abs(out.astype(jnp.float32) - ref.astype(jnp.float32)))
    assert err < 1e-1, f"max abs err {err} for B={B} S={S} H={H} O={O}"


if __name__ == "__main__":
    key = jax.random.PRNGKey(0)
    k_a, k_b, k_c = jax.random.split(key, 3)

    # Decode-shaped (M <= 64), 128-aligned dims: no-pad path, big weight tiles.
    _run_case(k_a, B=2, S=8, H=128, O=128)
    # Non-128-aligned dims (M=14, K=192, N=160): exercises zero-pad fallback.
    _run_case(k_b, B=2, S=7, H=192, O=160)
    # Prefill-shaped (M=128 > 64): exercises the prefill tile branch.
    _run_case(k_c, B=2, S=64, H=256, O=256)

    print("KERNEL_OK")
</pallas_src>

<mosaic_0001>
module attributes {stable_mosaic.version = 11 : i64} {
  func.func @_safe_q_proj_kernel(%arg0: i32, %arg1: i32, %arg2: i32, %arg3: memref<16x128xbf16, #tpu.memory_space<vmem>>, %arg4: memref<16x128xbf16, #tpu.memory_space<vmem>>, %arg5: memref<128x128xbf16, #tpu.memory_space<vmem>>, %arg6: memref<128x128xbf16, #tpu.memory_space<vmem>>, %arg7: memref<16x128xbf16, #tpu.memory_space<vmem>>, %arg8: memref<16x128xf32, #tpu.memory_space<vmem>>) attributes {dimension_semantics = [#tpu.dimension_semantics<parallel>, #tpu.dimension_semantics<parallel>, #tpu.dimension_semantics<arbitrary>], iteration_bounds = array<i64: 1, 1, 1>, scalar_prefetch = 0 : i64, scratch_operands = 1 : i64, tpu.core_type = #tpu.core_type<tc>, window_params = [{transform_indices = @transform_0, window_bounds = array<i64: 16, 128>}, {transform_indices = @transform_1, window_bounds = array<i64: 16, 128>}, {transform_indices = @transform_2, window_bounds = array<i64: 128, 128>}, {transform_indices = @transform_3, window_bounds = array<i64: 128, 128>}, {transform_indices = @transform_4, window_bounds = array<i64: 16, 128>}]} {
    %c0_i32 = arith.constant 0 : i32
    %0 = arith.cmpi eq, %arg2, %c0_i32 : i32
    %1 = arith.extui %0 : i1 to i32
    %c0_i32_0 = arith.constant 0 : i32
    %2 = arith.cmpi ne, %1, %c0_i32_0 : i32
    scf.if %2 {
      %cst_15 = arith.constant 0.000000e+00 : f32
      %16 = vector.broadcast %cst_15 : f32 to vector<16x128xf32>
      %c0_16 = arith.constant 0 : index
      %c0_17 = arith.constant 0 : index
      %17 = vector.load %arg8[%c0_16, %c0_17] : memref<16x128xf32, #tpu.memory_space<vmem>>, vector<16x128xf32>
      tpu.vector_store %arg8[%c0_16, %c0_17], %16 {strides = array<i32>} : memref<16x128xf32, #tpu.memory_space<vmem>>, vector<16x128xf32>,
    } else {
    }
    %c0 = arith.constant 0 : index
    %c0_1 = arith.constant 0 : index
    %3 = vector.load %arg8[%c0, %c0_1] : memref<16x128xf32, #tpu.memory_space<vmem>>, vector<16x128xf32>
    %c0_2 = arith.constant 0 : index
    %c0_3 = arith.constant 0 : index
    %4 = vector.load %arg3[%c0_2, %c0_3] : memref<16x128xbf16, #tpu.memory_space<vmem>>, vector<16x128xbf16>
    %c0_4 = arith.constant 0 : index
    %c0_5 = arith.constant 0 : index
    %5 = vector.load %arg5[%c0_4, %c0_5] : memref<128x128xbf16, #tpu.memory_space<vmem>>, vector<128x128xbf16>
    %cst = arith.constant dense<0.000000e+00> : vector<16x128xf32>
    %6 = tpu.matmul %4, %5, %cst {dimension_numbers = #tpu.dot_dimension_numbers<[1], [1], [0], [0], [0, 0, 1, 0], [], []>} : vector<16x128xbf16>, vector<128x128xbf16>, vector<16x128xf32> -> vector<16x128xf32>
    %c0_6 = arith.constant 0 : index
    %c0_7 = arith.constant 0 : index
    %7 = vector.load %arg4[%c0_6, %c0_7] : memref<16x128xbf16, #tpu.memory_space<vmem>>, vector<16x128xbf16>
    %c0_8 = arith.constant 0 : index
    %c0_9 = arith.constant 0 : index
    %8 = vector.load %arg6[%c0_8, %c0_9] : memref<128x128xbf16, #tpu.memory_space<vmem>>, vector<128x128xbf16>
    %cst_10 = arith.constant dense<0.000000e+00> : vector<16x128xf32>
    %9 = tpu.matmul %7, %8, %cst_10 {dimension_numbers = #tpu.dot_dimension_numbers<[1], [1], [0], [0], [0, 0, 1, 0], [], []>} : vector<16x128xbf16>, vector<128x128xbf16>, vector<16x128xf32> -> vector<16x128xf32>
    %10 = arith.addf %6, %9 : vector<16x128xf32>
    %11 = arith.addf %3, %10 : vector<16x128xf32>
    %c0_11 = arith.constant 0 : index
    %c0_12 = arith.constant 0 : index
    %12 = vector.load %arg8[%c0_11, %c0_12] : memref<16x128xf32, #tpu.memory_space<vmem>>, vector<16x128xf32>
    tpu.vector_store %arg8[%c0_11, %c0_12], %11 {strides = array<i32>} : memref<16x128xf32, #tpu.memory_space<vmem>>, vector<16x128xf32>,
    %c0_i32_13 = arith.constant 0 : i32
    %13 = arith.cmpi eq, %arg2, %c0_i32_13 : i32
    %14 = arith.extui %13 : i1 to i32
    %c0_i32_14 = arith.constant 0 : i32
    %15 = arith.cmpi ne, %14, %c0_i32_14 : i32
    scf.if %15 {
      %c0_15 = arith.constant 0 : index
      %c0_16 = arith.constant 0 : index
      %16 = vector.load %arg8[%c0_15, %c0_16] : memref<16x128xf32, #tpu.memory_space<vmem>>, vector<16x128xf32>
      %17 = arith.truncf %16 : vector<16x128xf32> to vector<16x128xbf16>
      %c0_17 = arith.constant 0 : index
      %c0_18 = arith.constant 0 : index
      %18 = vector.load %arg7[%c0_17, %c0_18] : memref<16x128xbf16, #tpu.memory_space<vmem>>, vector<16x128xbf16>
      tpu.vector_store %arg7[%c0_17, %c0_18], %17 {strides = array<i32>} : memref<16x128xbf16, #tpu.memory_space<vmem>>, vector<16x128xbf16>,
    } else {
    }
    return
  }
  func.func @transform_0(%arg0: i32, %arg1: i32, %arg2: i32) -> (i32, i32) {
    %c0_i32 = arith.constant 0 : i32
    return %arg0, %arg2 : i32, i32
  }
  func.func @transform_1(%arg0: i32, %arg1: i32, %arg2: i32) -> (i32, i32) {
    %c0_i32 = arith.constant 0 : i32
    return %arg0, %arg2 : i32, i32
  }
  func.func @transform_2(%arg0: i32, %arg1: i32, %arg2: i32) -> (i32, i32) {
    %c0_i32 = arith.constant 0 : i32
    return %arg1, %arg2 : i32, i32
  }
  func.func @transform_3(%arg0: i32, %arg1: i32, %arg2: i32) -> (i32, i32) {
    %c0_i32 = arith.constant 0 : i32
    return %arg1, %arg2 : i32, i32
  }
  func.func @transform_4(%arg0: i32, %arg1: i32, %arg2: i32) -> (i32, i32) {
    %c0_i32 = arith.constant 0 : i32
    return %arg0, %arg1 : i32, i32
  }
}

</mosaic_0001>

<llo_original>
// kernel: tpu_custom_call.1
$region0: #{tpu_custom_call.1}
  #allocation0 [shape = 'u32[]', space=smem, size = 0x4, offset = 0x4, fixed_abs, tag = 'smem constant byte address 0x4 - core index']
  #allocation1 [shape = 'u32[72,128]{1,0:T(1,128)}', space=vmem, size = 0x9000, scoped, tag = 'internal scratch']
  #allocation2 [shape = 'f32[16,128]{1,0:T(8,128)}', space=vmem, size = 0x2000, scoped, tag = 'scratch operand']
  %s0 = inlined_call_operand.hbm [shape: bf16[16,128], index: 0, kind: input, shape index: {}]
  %s1 = inlined_call_operand.hbm [shape: bf16[16,128], index: 1, kind: input, shape index: {}]
  %s2 = inlined_call_operand.hbm [shape: bf16[128,128], index: 2, kind: input, shape index: {}]
  %s3 = inlined_call_operand.hbm [shape: bf16[128,128], index: 3, kind: input, shape index: {}]
  %s4 = inlined_call_operand.hbm [shape: bf16[16,128], index: 4, kind: output, shape index: {}]
  %s5 = sld [smem:[#allocation0]]
  $region50: #{tpu_custom_call.1} parent=0
    _
  %s7 = ssub.s32 1, %s5
  %s8 = scalar_select 0, %s7, %s5
  $region1: #{tpu_custom_call.1} parent=0
    #allocation3 [shape = 'u8[4096]{0}', space=vmem, size = 0x1000, scoped, tag = 'input window, operand 0, single buffered']
    #allocation4 [shape = 's32[1]{0}', space=sflag, size = 0x4, scoped, tag = 'scoped memory for tpu_custom_call.1']
    #allocation5 [shape = 's32[1]{0}', space=sflag, size = 0x4, scoped, tag = 'scoped memory for tpu_custom_call.1']
    #allocation6 [shape = 'u8[4096]{0}', space=vmem, size = 0x1000, scoped, tag = 'input window, operand 1, single buffered']
    #allocation7 [shape = 's32[1]{0}', space=sflag, size = 0x4, scoped, tag = 'scoped memory for tpu_custom_call.1']
    #allocation8 [shape = 'u8[32768]{0}', space=vmem, size = 0x8000, scoped, tag = 'input window, operand 2, single buffered']
    #allocation9 [shape = 'u8[32768]{0}', space=vmem, size = 0x8000, scoped, tag = 'input window, operand 3, single buffered']
    #allocation10 [shape = 's32[1]{0}', space=sflag, size = 0x4, scoped, tag = 'scoped memory for tpu_custom_call.1']
    #allocation11 [shape = 'u8[4096]{0}', space=vmem, size = 0x1000, scoped, tag = 'output window, operand 0, single buffered']
    %9 = vsyncpa [#allocation4], 0
    %10 = vsyncpa [#allocation7], 0
    %11 = vsyncpa [#allocation10], 0
    %12 = vsyncpa [#allocation5], 0
    // Predicated region
    $region2: #{tpu_custom_call.1} parent=1 // pred_check
      _
    $region3: #{tpu_custom_call.1} parent=1 // pred_check_branch
      %14 = sbr.rel (0) target = $region5
    $region4: #{tpu_custom_call.1} parent=1 // pred_region
      %16 = vsyncadd [#allocation4], 0
      %s17 = sshll.u32 %s0, 4
      %s18 = int_to_ptr.hbm [resolvable:$true] %s17
      %s19 = sshll.u32 [#allocation3], 4
      %s20 = int_to_ptr.vmem [resolvable:$true] %s19
      %25 = dma.hbm_to_vmem [thread:$0]  %s18, 128, %s20, [#allocation4], 64, 64, 4
    $region5: #{tpu_custom_call.1} parent=1 // pred_fallthru
      _
    // Predicated region
    $region6: #{tpu_custom_call.1} parent=1 // pred_check
      _
    $region7: #{tpu_custom_call.1} parent=1 // pred_check_branch
      %27 = sbr.rel (0) target = $region9
    $region8: #{tpu_custom_call.1} parent=1 // pred_region
      %29 = vsyncadd [#allocation7], 0
      %s30 = sshll.u32 %s1, 4
      %s31 = int_to_ptr.hbm [resolvable:$true] %s30
      %s32 = sshll.u32 [#allocation6], 4
      %s33 = int_to_ptr.vmem [resolvable:$true] %s32
      %38 = dma.hbm_to_vmem [thread:$0]  %s31, 128, %s33, [#allocation7], 64, 64, 4
    $region9: #{tpu_custom_call.1} parent=1 // pred_fallthru
      _
    // Predicated region
    $region10: #{tpu_custom_call.1} parent=1 // pred_check
      _
    $region11: #{tpu_custom_call.1} parent=1 // pred_check_branch
      %40 = sbr.rel (0) target = $region13
    $region12: #{tpu_custom_call.1} parent=1 // pred_region
      %42 = vsyncadd [#allocation7], 0
      %s43 = sshll.u32 %s2, 4
      %s44 = int_to_ptr.hbm [resolvable:$true] %s43
      %s45 = sshll.u32 [#allocation8], 4
      %s46 = int_to_ptr.vmem [resolvable:$true] %s45
      %51 = dma.hbm_to_vmem [thread:$0]  %s44, 1024, %s46, [#allocation7], 64, 64, 4
    $region13: #{tpu_custom_call.1} parent=1 // pred_fallthru
      _
    // Predicated region
    $region14: #{tpu_custom_call.1} parent=1 // pred_check
      _
    $region15: #{tpu_custom_call.1} parent=1 // pred_check_branch
      %53 = sbr.rel (0) target = $region17
    $region16: #{tpu_custom_call.1} parent=1 // pred_region
      %55 = vsyncadd [#allocation10], 0
      %s56 = sshll.u32 %s3, 4
      %s57 = int_to_ptr.hbm [resolvable:$true] %s56
      %s58 = sshll.u32 [#allocation9], 4
      %s59 = int_to_ptr.vmem [resolvable:$true] %s58
      %64 = dma.hbm_to_vmem [thread:$0]  %s57, 1024, %s59, [#allocation10], 64, 64, 4
    $region17: #{tpu_custom_call.1} parent=1 // pred_fallthru
      _
    // Predicated region
    $region18: #{tpu_custom_call.1} parent=1 // pred_check
      _
    $region19: #{tpu_custom_call.1} parent=1 // pred_check_branch
      %66 = sbr.rel (0) target = $region21
    $region20: #{tpu_custom_call.1} parent=1 // pred_region
      %68 = dma.done [#allocation4], 128
    $region21: #{tpu_custom_call.1} parent=1 // pred_fallthru
      _
    // Predicated region
    $region22: #{tpu_custom_call.1} parent=1 // pred_check
      _
    $region23: #{tpu_custom_call.1} parent=1 // pred_check_branch
      %70 = sbr.rel (0) target = $region25
    $region24: #{tpu_custom_call.1} parent=1 // pred_region
      %72 = dma.done [#allocation7], 128
    $region25: #{tpu_custom_call.1} parent=1 // pred_fallthru
      _
    // Predicated region
    $region26: #{tpu_custom_call.1} parent=1 // pred_check
      _
    $region27: #{tpu_custom_call.1} parent=1 // pred_check_branch
      %74 = sbr.rel (0) target = $region29
    $region28: #{tpu_custom_call.1} parent=1 // pred_region
      %76 = dma.done [#allocation7], 1024
    $region29: #{tpu_custom_call.1} parent=1 // pred_fallthru
      _
    // Predicated region
    $region30: #{tpu_custom_call.1} parent=1 // pred_check
      _
    $region31: #{tpu_custom_call.1} parent=1 // pred_check_branch
      %78 = sbr.rel (0) target = $region33
    $region32: #{tpu_custom_call.1} parent=1 // pred_region
      %80 = dma.done [#allocation10], 1024
    $region33: #{tpu_custom_call.1} parent=1 // pred_fallthru
      _
    %p81 = scmp.eq.s32.totalorder 0, 0
    // Predicated region
    $region34: #{tpu_custom_call.1} parent=1 // pred_check
      %p82 = pneg %p81
    $region35: #{tpu_custom_call.1} parent=1 // pred_check_branch
      %84 = sbr.rel (%p82) target = $region37
    $region36: #{tpu_custom_call.1} parent=1 // pred_region
      %85 = vst [vmem:[#allocation2] sm:$0xff] 0.0
      %86 = vst [vmem:[#allocation2 + $0x8] sm:$0xff] 0.0
    $region37: #{tpu_custom_call.1} parent=1 // pred_fallthru
      _
    %v87 = vld [vmem:[#allocation2] sm:$0xff]
    %v88 = vld [vmem:[#allocation2 + $0x8] sm:$0xff]
    %v89 = vld [vmem:[#allocation3] sm:$0xf]
    %v90 = vld [vmem:[#allocation3 + $0x4] sm:$0xf]
    %v91 = vld [vmem:[#allocation8] sm:$0xf]
    %v92 = vld [vmem:[#allocation8 + $0x4] sm:$0xf]
    %v93 = vld [vmem:[#allocation8 + $0x8] sm:$0xf]
    %v94 = vld [vmem:[#allocation8 + $0xc] sm:$0xf]
    %v95 = vld [vmem:[#allocation8 + $0x10] sm:$0xf]
    %v96 = vld [vmem:[#allocation8 + $0x14] sm:$0xf]
    %v97 = vld [vmem:[#allocation8 + $0x18] sm:$0xf]
    %v98 = vld [vmem:[#allocation8 + $0x1c] sm:$0xf]
    %v99 = vld [vmem:[#allocation8 + $0x20] sm:$0xf]
    %v100 = vld [vmem:[#allocation8 + $0x24] sm:$0xf]
    %v101 = vld [vmem:[#allocation8 + $0x28] sm:$0xf]
    %v102 = vld [vmem:[#allocation8 + $0x2c] sm:$0xf]
    %v103 = vld [vmem:[#allocation8 + $0x30] sm:$0xf]
    %v104 = vld [vmem:[#allocation8 + $0x34] sm:$0xf]
    %v105 = vld [vmem:[#allocation8 + $0x38] sm:$0xf]
    %v106 = vld [vmem:[#allocation8 + $0x3c] sm:$0xf]
    %v107 = vld [vmem:[#allocation6] sm:$0xf]
    %v108 = vld [vmem:[#allocation6 + $0x4] sm:$0xf]
    %v109 = vld [vmem:[#allocation9] sm:$0xf]
    %v110 = vld [vmem:[#allocation9 + $0x4] sm:$0xf]
    %v111 = vld [vmem:[#allocation9 + $0x8] sm:$0xf]
    %v112 = vld [vmem:[#allocation9 + $0xc] sm:$0xf]
    %v113 = vld [vmem:[#allocation9 + $0x10] sm:$0xf]
    %v114 = vld [vmem:[#allocation9 + $0x14] sm:$0xf]
    %v115 = vld [vmem:[#allocation9 + $0x18] sm:$0xf]
    %v116 = vld [vmem:[#allocation9 + $0x1c] sm:$0xf]
    %v117 = vld [vmem:[#allocation9 + $0x20] sm:$0xf]
    %v118 = vld [vmem:[#allocation9 + $0x24] sm:$0xf]
    %v119 = vld [vmem:[#allocation9 + $0x28] sm:$0xf]
    %v120 = vld [vmem:[#allocation9 + $0x2c] sm:$0xf]
    %v121 = vld [vmem:[#allocation9 + $0x30] sm:$0xf]
    %v122 = vld [vmem:[#allocation9 + $0x34] sm:$0xf]
    %v123 = vld [vmem:[#allocation9 + $0x38] sm:$0xf]
    %v124 = vld [vmem:[#allocation9 + $0x3c] sm:$0xf]
    %v127 = vunpack.c.l.b16 %v107
    %v128 = vunpack.c.l.b16 %v108
    %v129 = vpack.c.b16 %v128, %v127
    %v147 = vunpack.c.l.b16 %v109
    %v148 = vunpack.c.l.b16 %v110
    %v149 = vunpack.c.l.b16 %v111
    %v150 = vunpack.c.l.b16 %v112
    %v151 = vunpack.c.l.b16 %v113
    %v152 = vunpack.c.l.b16 %v114
    %v153 = vunpack.c.l.b16 %v115
    %v154 = vunpack.c.l.b16 %v116
    %v155 = vunpack.c.l.b16 %v117
    %v156 = vunpack.c.l.b16 %v118
    %v157 = vunpack.c.l.b16 %v119
    %v158 = vunpack.c.l.b16 %v120
    %v159 = vunpack.c.l.b16 %v121
    %v160 = vunpack.c.l.b16 %v122
    %v161 = vunpack.c.l.b16 %v123
    %v162 = vunpack.c.l.b16 %v124
    %v163 = vpack.c.b16 %v148, %v147
    %v164 = vpack.c.b16 %v150, %v149
    %v165 = vpack.c.b16 %v152, %v151
    %v166 = vpack.c.b16 %v154, %v153
    %v167 = vpack.c.b16 %v156, %v155
    %v168 = vpack.c.b16 %v158, %v157
    %v169 = vpack.c.b16 %v160, %v159
    %v170 = vpack.c.b16 %v162, %v161
    %179 = vmatpush.bf16.xpose.msra.mxu0 %v170
    %180 = vmatpush.bf16.xpose.msra.mxu0 %v169
    %181 = vmatpush.bf16.xpose.msra.mxu0 %v168
    %182 = vmatpush.bf16.xpose.msra.mxu0 %v167
    %183 = vmatpush.bf16.xpose.msra.mxu0 %v166
    %184 = vmatpush.bf16.xpose.msra.mxu0 %v165
    %185 = vmatpush.bf16.xpose.msra.mxu0 %v164
    %186 = vmatpush.bf16.xpose.msra.mxu0 %v163
    %187 = vmatmul.bf16.gmra.mxu0 %v129
    %v188 = vpop.f32.mrf.mxu0
    %v189 = vadd.f32 0.0, %v188
    %v190 = vpop.f32.mrf.mxu0
    %v191 = vadd.f32 0.0, %v190
    %192 = vdwg.mxu0
    %v195 = vunpack.c.l.b16 %v89
    %v196 = vunpack.c.l.b16 %v90
    %v197 = vpack.c.b16 %v196, %v195
    %v215 = vunpack.c.l.b16 %v91
    %v216 = vunpack.c.l.b16 %v92
    %v217 = vunpack.c.l.b16 %v93
    %v218 = vunpack.c.l.b16 %v94
    %v219 = vunpack.c.l.b16 %v95
    %v220 = vunpack.c.l.b16 %v96
    %v221 = vunpack.c.l.b16 %v97
    %v222 = vunpack.c.l.b16 %v98
    %v223 = vunpack.c.l.b16 %v99
    %v224 = vunpack.c.l.b16 %v100
    %v225 = vunpack.c.l.b16 %v101
    %v226 = vunpack.c.l.b16 %v102
    %v227 = vunpack.c.l.b16 %v103
    %v228 = vunpack.c.l.b16 %v104
    %v229 = vunpack.c.l.b16 %v105
    %v230 = vunpack.c.l.b16 %v106
    %v231 = vpack.c.b16 %v216, %v215
    %v232 = vpack.c.b16 %v218, %v217
    %v233 = vpack.c.b16 %v220, %v219
    %v234 = vpack.c.b16 %v222, %v221
    %v235 = vpack.c.b16 %v224, %v223
    %v236 = vpack.c.b16 %v226, %v225
    %v237 = vpack.c.b16 %v228, %v227
    %v238 = vpack.c.b16 %v230, %v229
    %247 = vmatpush.bf16.xpose.msra.mxu0 %v238
    %248 = vmatpush.bf16.xpose.msra.mxu0 %v237
    %249 = vmatpush.bf16.xpose.msra.mxu0 %v236
    %250 = vmatpush.bf16.xpose.msra.mxu0 %v235
    %251 = vmatpush.bf16.xpose.msra.mxu0 %v234
    %252 = vmatpush.bf16.xpose.msra.mxu0 %v233
    %253 = vmatpush.bf16.xpose.msra.mxu0 %v232
    %254 = vmatpush.bf16.xpose.msra.mxu0 %v231
    %255 = vmatmul.bf16.gmra.mxu0 %v197
    %v256 = vpop.f32.mrf.mxu0
    %v257 = vadd.f32 %v189, %v256
    %v258 = vpop.f32.mrf.mxu0
    %v259 = vadd.f32 %v191, %v258
    %260 = vdwg.mxu0
    %v261 = vadd.f32 %v87, %v257
    %v262 = vadd.f32 %v88, %v259
    %263 = vst [vmem:[#allocation2] sm:$0xff] %v261
    %264 = vst [vmem:[#allocation2 + $0x8] sm:$0xff] %v262
    // Predicated region
    $region38: #{tpu_custom_call.1} parent=1 // pred_check
      %p265 = pneg %p81
    $region39: #{tpu_custom_call.1} parent=1 // pred_check_branch
      %267 = sbr.rel (%p265) target = $region41
    $region40: #{tpu_custom_call.1} parent=1 // pred_region
      %v268 = vld [vmem:[#allocation2] sm:$0xff]
      %v269 = vld [vmem:[#allocation2 + $0x8] sm:$0xff]
      %v270 = vpack.c.bf16 %v268, %v268
      %v271 = vpack.c.bf16 %v269, %v269
      %272 = vst [vmem:[#allocation11] sm:$0xf] %v270
      %273 = vst [vmem:[#allocation11 + $0x4] sm:$0xf] %v271
    $region41: #{tpu_custom_call.1} parent=1 // pred_fallthru
      _
    // Predicated region
    $region42: #{tpu_custom_call.1} parent=1 // pred_check
      _
    $region43: #{tpu_custom_call.1} parent=1 // pred_check_branch
      %275 = sbr.rel (0) target = $region45
    $region44: #{tpu_custom_call.1} parent=1 // pred_region
      %277 = vsyncadd [#allocation5], 0
      %s278 = sshll.u32 [#allocation11], 4
      %s279 = int_to_ptr.vmem [resolvable:$true] %s278
      %s280 = sshll.u32 %s4, 4
      %s281 = int_to_ptr.hbm [resolvable:$true] %s280
      %286 = dma.vmem_to_hbm [thread:$0]  %s279, 128, %s281, [#allocation5], 64, 64, 4
    $region45: #{tpu_custom_call.1} parent=1 // pred_fallthru
      _
    // Predicated region
    $region46: #{tpu_custom_call.1} parent=1 // pred_check
      _
    $region47: #{tpu_custom_call.1} parent=1 // pred_check_branch
      %288 = sbr.rel (0) target = $region49
    $region48: #{tpu_custom_call.1} parent=1 // pred_region
      %290 = dma.done [#allocation5], 128
    $region49: #{tpu_custom_call.1} parent=1 // pred_fallthru
      _
    %291 = vsyncpa [#allocation4], 1
    %292 = vsyncpa [#allocation7], 1
    %293 = vsyncpa [#allocation10], 1
    %294 = vsyncpa [#allocation5], 1

</llo_original>
